<compile_context>
chip_gen: v5e
topology: v5e:2x2
jax: 0.10.0
libtpu: 0.0.40
codegen_flags: <defaults>
</compile_context>

<pallas_src>
import numpy as np
import jax
import jax.numpy as jnp
from jax import lax
from jax.experimental import pallas as pl
from jax.experimental.pallas import tpu as pltpu

LOGIT_TEMP = 0.1
INV_LOGIT_TEMP = 1.0 / LOGIT_TEMP
EPS = 1e-8


def _round_up(x, m):
    return (x + m - 1) // m * m


# ---------------------------------------------------------------------------
# Fused kernel: final_proj + cosine-similarity logits for one block of frames.
#   x_ref      [bm, E]   (compute dtype, e.g. bf16)
#   lab_ref    [bm, 1]   int32 labels
#   wt_ref     [E, D]    final_proj weight, pre-transposed (resident)
#   b_ref      [1, D]    final_proj bias, f32 (resident)
#   embt_ref   [D, W]    label embeddings, pre-transposed and shifted so that
#                        column j+1 holds class j; column 0 and cols > C are zero
#   inv_en_ref [1, W]    INV_LOGIT_TEMP / max(||emb||, eps), same column layout
#   o_ref      [bm, W]   f32; column 0 = positive logit, columns 1..C = negatives
# ---------------------------------------------------------------------------
def _hubert_logits_kernel(x_ref, lab_ref, wt_ref, b_ref, embt_ref, inv_en_ref, o_ref):
    # final_proj: MXU matmul (bf16 in, f32 accumulate) + bias
    proj = jnp.dot(x_ref[...], wt_ref[...], preferred_element_type=jnp.float32)
    proj = proj + b_ref[...]                                        # [bm, D] f32

    # per-row 1/||proj|| with eps clamp: 1/max(||p||, eps) == min(rsqrt(ss), 1/eps)
    ss = jnp.sum(proj * proj, axis=-1, keepdims=True)               # [bm, 1]
    inv_pn = jnp.minimum(lax.rsqrt(ss), 1.0 / EPS)                  # EUP rsqrt

    # negatives: MXU matmul against the resident, pre-transposed embedding table
    dot_neg = jnp.dot(proj.astype(embt_ref.dtype), embt_ref[...],
                      preferred_element_type=jnp.float32)           # [bm, W]

    inv_en = inv_en_ref[...]                                        # [1, W] f32 (temp folded in)
    col = lax.broadcasted_iota(jnp.int32, dot_neg.shape, 1)         # [bm, W]
    # column layout is shifted by one, so class `lab` lives in column lab + 1
    is_pos = col == (lab_ref[...] + 1)                              # [bm, W] bool
    one_hot = is_pos.astype(jnp.float32)

    # positive logit derived from the matching negative column (no [N, D] pos DMA)
    dot_pos = jnp.sum(dot_neg * one_hot, axis=-1, keepdims=True)    # [bm, 1]
    inv_posn = jnp.sum(inv_en * one_hot, axis=-1, keepdims=True)    # [bm, 1]

    logit_pos = dot_pos * (inv_pn * inv_posn)                       # [bm, 1]
    logits = (dot_neg * inv_pn) * inv_en                            # [bm, W]
    # neg_is_pos -> -inf (negatives identical to the positive class)
    logits = jnp.where(is_pos, -jnp.inf, logits)

    # single lane-dense full-block store; column 0 carries the positive logit
    o_ref[...] = jnp.where(col == 0, logit_pos, logits).astype(o_ref.dtype)


# ---------------------------------------------------------------------------
# LogitGenerator forward (masked + unmasked branches share one kernel pass).
# ---------------------------------------------------------------------------
def logit_generator_forward(
    x, label, idx_m, idx_u, w, b, label_embeddings,
    skip_masked=False, skip_nomask=False,
    block_m=256, compute_dtype=jnp.bfloat16,
):
    if skip_masked and skip_nomask:
        return None, None

    B, T, E = x.shape
    D = w.shape[0]                      # torch Linear weight is [out=D, in=E]
    C = label_embeddings.shape[0]
    M = B * T

    W = _round_up(C + 1, 128)           # lane-dense output width

    bm = min(block_m, _round_up(M, 8))
    bm = _round_up(bm, 8)
    M_pad = _round_up(M, bm)
    grid_m = M_pad // bm

    # ---- operand prep (layout plumbing only; heavy math is in the kernel) ----
    x_flat = x.reshape(M, E).astype(compute_dtype)
    lab_flat = label.reshape(M, 1).astype(jnp.int32)
    if M_pad != M:
        x_flat = jnp.pad(x_flat, ((0, M_pad - M), (0, 0)))
        lab_flat = jnp.pad(lab_flat, ((0, M_pad - M), (0, 0)))

    w_t = w.T.astype(compute_dtype)                                  # [E, D]
    b2 = b.reshape(1, D).astype(jnp.float32)

    # Embedding table pre-transposed to [D, W], shifted one column right so the
    # negatives matmul writes class j into output column j + 1 (column 0 = pos).
    emb_t = jnp.zeros((D, W), dtype=compute_dtype)
    emb_t = emb_t.at[:, 1:C + 1].set(label_embeddings.T.astype(compute_dtype))

    # Reciprocal class-embedding norms with 1/logit_temp folded in, precomputed
    # once, shared by both branches.
    en = jnp.sqrt(jnp.sum(label_embeddings.astype(jnp.float32) ** 2, axis=-1))
    inv_en = jnp.zeros((1, W), dtype=jnp.float32)
    inv_en = inv_en.at[0, 1:C + 1].set(INV_LOGIT_TEMP / jnp.maximum(en, EPS))

    cb = jnp.dtype(compute_dtype).itemsize
    resident = E * D * cb + D * W * cb + D * 4 + W * 4
    per_block = bm * E * cb + bm * 4 + bm * W * 4
    vmem_limit = int(min(max(4 * (resident + 2 * per_block), 32 * 1024 * 1024),
                         64 * 1024 * 1024))

    cost = pl.CostEstimate(
        flops=int(2 * M_pad * E * D + 2 * M_pad * D * W + 8 * M_pad * W),
        transcendentals=int(M_pad),
        bytes_accessed=int(M_pad * E * cb + M_pad * 4 + resident + M_pad * W * 4),
    )

    logits_all = pl.pallas_call(
        _hubert_logits_kernel,
        out_shape=jax.ShapeDtypeStruct((M_pad, W), jnp.float32),
        grid=(grid_m,),
        in_specs=[
            pl.BlockSpec((bm, E), lambda i: (i, 0)),     # x tile (pipelined)
            pl.BlockSpec((bm, 1), lambda i: (i, 0)),     # labels tile
            pl.BlockSpec((E, D), lambda i: (0, 0)),      # proj weight (resident)
            pl.BlockSpec((1, D), lambda i: (0, 0)),      # proj bias (resident)
            pl.BlockSpec((D, W), lambda i: (0, 0)),      # emb^T, shifted (resident)
            pl.BlockSpec((1, W), lambda i: (0, 0)),      # scaled 1/||emb|| (resident)
        ],
        out_specs=pl.BlockSpec((bm, W), lambda i: (i, 0)),
        compiler_params=pltpu.CompilerParams(
            dimension_semantics=("parallel",),
            vmem_limit_bytes=vmem_limit,
        ),
        cost_estimate=cost,
    )(x_flat, lab_flat, w_t, b2, emb_t, inv_en)

    logits_all = logits_all[:M, :C + 1]                  # drop row/lane padding
    logit_m = None if skip_masked else logits_all[idx_m]
    logit_u = None if skip_nomask else logits_all[idx_u]
    return logit_m, logit_u


# ---------------------------------------------------------------------------
# Pure-JAX f32 reference (mirrors the torch module) for a loose sanity check.
# ---------------------------------------------------------------------------
def _reference_logits(x, label, idx, w, b, emb):
    B, T, E = x.shape
    M = B * T
    proj = x.reshape(M, E).astype(jnp.float32) @ w.T.astype(jnp.float32) + b
    proj_sel = proj[idx]
    lab_sel = label.reshape(M)[idx]
    pos = emb[lab_sel]

    def _cos(a, c):
        num = jnp.sum(a * c, axis=-1)
        den = (jnp.maximum(jnp.linalg.norm(a, axis=-1), EPS)
               * jnp.maximum(jnp.linalg.norm(c, axis=-1), EPS))
        return num / den

    cos_pos = _cos(proj_sel, pos)                                    # [N]
    cos_neg = _cos(proj_sel[:, None, :], emb[None, :, :])            # [N, C]
    logits = jnp.concatenate([cos_pos[:, None], cos_neg], axis=-1) / LOGIT_TEMP
    neg_is_pos = jnp.all(pos[:, None, :] == emb[None, :, :], axis=-1)
    logits = logits.at[:, 1:].set(
        jnp.where(neg_is_pos, -jnp.inf, logits[:, 1:]))
    return logits


# ---------------------------------------------------------------------------
if __name__ == "__main__":
    # Small synthetic configuration.
    B, T = 2, 8                 # batch, frame
    E = 32                      # encoder_embed_dim
    D = 16                      # final_dim
    C = 12                      # num_classes

    key = jax.random.PRNGKey(0)
    k1, k2, k3, k4, k5 = jax.random.split(key, 5)

    x = jax.random.normal(k1, (B, T, E), dtype=jnp.float32)
    label = jax.random.randint(k2, (B, T), 0, C, dtype=jnp.int32)

    # Deterministic boolean masks (mask_u = ~mask_m); selection indices via numpy.
    mask_m_np = np.zeros((B, T), dtype=bool)
    mask_m_np[:, ::2] = True
    mask_u_np = ~mask_m_np
    idx_m = jnp.asarray(np.nonzero(mask_m_np.reshape(-1))[0], dtype=jnp.int32)
    idx_u = jnp.asarray(np.nonzero(mask_u_np.reshape(-1))[0], dtype=jnp.int32)

    # Parameters (same shapes/init style as the nn.Module).
    label_embeddings = jax.random.uniform(k3, (C, D), dtype=jnp.float32)
    bound = 1.0 / np.sqrt(E)
    w = jax.random.uniform(k4, (D, E), dtype=jnp.float32, minval=-bound, maxval=bound)
    b = jax.random.uniform(k5, (D,), dtype=jnp.float32, minval=-bound, maxval=bound)

    logit_m, logit_u = logit_generator_forward(
        x, label, idx_m, idx_u, w, b, label_embeddings,
        skip_masked=False, skip_nomask=False,
        block_m=8,                      # small block to exercise the row tiling
        compute_dtype=jnp.bfloat16,     # bf16 into the MXU, f32 accumulate/VPU
    )
    jax.block_until_ready((logit_m, logit_u))

    assert logit_m.shape == (int(idx_m.shape[0]), C + 1)
    assert logit_u.shape == (int(idx_u.shape[0]), C + 1)
    assert logit_m.dtype == jnp.float32 and logit_u.dtype == jnp.float32
    assert bool(jnp.isfinite(logit_m[:, 0]).all())       # positive logits finite

    # Loose numerical check against the f32 reference (bf16 MXU tolerance).
    for got, idx in ((logit_m, idx_m), (logit_u, idx_u)):
        ref = _reference_logits(x, label, idx, w, b, label_embeddings)
        fin = jnp.isfinite(ref)
        assert bool(jnp.array_equal(fin, jnp.isfinite(got)))   # same -inf pattern
        diff = float(jnp.max(jnp.abs(jnp.where(fin, got - ref, 0.0))))
        assert diff < 0.35, f"max abs diff {diff}"

    print("KERNEL_OK")
</pallas_src>

<mosaic_0001>
module attributes {stable_mosaic.version = 11 : i64} {
  func.func @_hubert_logits_kernel(%arg0: i32, %arg1: memref<8x32xbf16, #tpu.memory_space<vmem>>, %arg2: memref<8x1xi32, #tpu.memory_space<vmem>>, %arg3: memref<32x16xbf16, #tpu.memory_space<vmem>>, %arg4: memref<1x16xf32, #tpu.memory_space<vmem>>, %arg5: memref<16x128xbf16, #tpu.memory_space<vmem>>, %arg6: memref<1x128xf32, #tpu.memory_space<vmem>>, %arg7: memref<8x128xf32, #tpu.memory_space<vmem>>) attributes {dimension_semantics = [#tpu.dimension_semantics<parallel>], iteration_bounds = array<i64: 2>, scalar_prefetch = 0 : i64, scratch_operands = 0 : i64, tpu.core_type = #tpu.core_type<tc>, window_params = [{transform_indices = @transform_0, window_bounds = array<i64: 8, 32>}, {transform_indices = @transform_1, window_bounds = array<i64: 8, 1>}, {pipeline_mode = #tpu.pipeline_mode<synchronous>, transform_indices = @transform_2, window_bounds = array<i64: 32, 16>}, {pipeline_mode = #tpu.pipeline_mode<synchronous>, transform_indices = @transform_3, window_bounds = array<i64: 1, 16>}, {pipeline_mode = #tpu.pipeline_mode<synchronous>, transform_indices = @transform_4, window_bounds = array<i64: 16, 128>}, {pipeline_mode = #tpu.pipeline_mode<synchronous>, transform_indices = @transform_5, window_bounds = array<i64: 1, 128>}, {transform_indices = @transform_6, window_bounds = array<i64: 8, 128>}]} {
    %c0 = arith.constant 0 : index
    %c0_0 = arith.constant 0 : index
    %0 = vector.load %arg1[%c0, %c0_0] : memref<8x32xbf16, #tpu.memory_space<vmem>>, vector<8x32xbf16>
    %c0_1 = arith.constant 0 : index
    %c0_2 = arith.constant 0 : index
    %1 = vector.load %arg3[%c0_1, %c0_2] : memref<32x16xbf16, #tpu.memory_space<vmem>>, vector<32x16xbf16>
    %cst = arith.constant dense<0.000000e+00> : vector<8x16xf32>
    %2 = tpu.matmul %0, %1, %cst {dimension_numbers = #tpu.dot_dimension_numbers<[1], [0], [0], [1], [0, 0, 1, 1], [], []>} : vector<8x32xbf16>, vector<32x16xbf16>, vector<8x16xf32> -> vector<8x16xf32>
    %c0_3 = arith.constant 0 : index
    %c0_4 = arith.constant 0 : index
    %3 = vector.load %arg4[%c0_3, %c0_4] : memref<1x16xf32, #tpu.memory_space<vmem>>, vector<1x16xf32>
    %4 = vector.broadcast %3 : vector<1x16xf32> to vector<8x16xf32>
    %5 = arith.addf %2, %4 : vector<8x16xf32>
    %6 = arith.mulf %5, %5 : vector<8x16xf32>
    %cst_5 = arith.constant dense<0.000000e+00> : vector<8xf32>
    %7 = vector.multi_reduction <add>, %6, %cst_5 [1] : vector<8x16xf32> to vector<8xf32>
    %8 = vector.shape_cast %7 : vector<8xf32> to vector<8x1xf32>
    %9 = math.rsqrt %8 : vector<8x1xf32>
    %cst_6 = arith.constant 1.000000e+08 : f32
    %10 = vector.broadcast %cst_6 : f32 to vector<8x1xf32>
    %11 = arith.minimumf %9, %10 : vector<8x1xf32>
    %12 = arith.truncf %5 : vector<8x16xf32> to vector<8x16xbf16>
    %c0_7 = arith.constant 0 : index
    %c0_8 = arith.constant 0 : index
    %13 = vector.load %arg5[%c0_7, %c0_8] : memref<16x128xbf16, #tpu.memory_space<vmem>>, vector<16x128xbf16>
    %cst_9 = arith.constant dense<0.000000e+00> : vector<8x128xf32>
    %14 = tpu.matmul %12, %13, %cst_9 {dimension_numbers = #tpu.dot_dimension_numbers<[1], [0], [0], [1], [0, 0, 1, 1], [], []>} : vector<8x16xbf16>, vector<16x128xbf16>, vector<8x128xf32> -> vector<8x128xf32>
    %c0_10 = arith.constant 0 : index
    %c0_11 = arith.constant 0 : index
    %15 = vector.load %arg6[%c0_10, %c0_11] : memref<1x128xf32, #tpu.memory_space<vmem>>, vector<1x128xf32>
    %16 = tpu.iota {dimensions = array<i32: 1>} : vector<8x128xi32>
    %c0_12 = arith.constant 0 : index
    %c0_13 = arith.constant 0 : index
    %17 = vector.load %arg2[%c0_12, %c0_13] : memref<8x1xi32, #tpu.memory_space<vmem>>, vector<8x1xi32>
    %c1_i32 = arith.constant 1 : i32
    %18 = vector.broadcast %c1_i32 : i32 to vector<8x1xi32>
    %19 = arith.addi %17, %18 : vector<8x1xi32>
    %20 = vector.broadcast %19 : vector<8x1xi32> to vector<8x128xi32>
    %21 = arith.cmpi eq, %16, %20 : vector<8x128xi32>
    %22 = arith.extui %21 : vector<8x128xi1> to vector<8x128xi32>
    %23 = arith.sitofp %22 : vector<8x128xi32> to vector<8x128xf32>
    %24 = arith.mulf %14, %23 : vector<8x128xf32>
    %cst_14 = arith.constant dense<0.000000e+00> : vector<8xf32>
    %25 = vector.multi_reduction <add>, %24, %cst_14 [1] : vector<8x128xf32> to vector<8xf32>
    %26 = vector.shape_cast %25 : vector<8xf32> to vector<8x1xf32>
    %27 = vector.broadcast %15 : vector<1x128xf32> to vector<8x128xf32>
    %28 = arith.mulf %27, %23 : vector<8x128xf32>
    %cst_15 = arith.constant dense<0.000000e+00> : vector<8xf32>
    %29 = vector.multi_reduction <add>, %28, %cst_15 [1] : vector<8x128xf32> to vector<8xf32>
    %30 = vector.shape_cast %29 : vector<8xf32> to vector<8x1xf32>
    %31 = arith.mulf %11, %30 : vector<8x1xf32>
    %32 = arith.mulf %26, %31 : vector<8x1xf32>
    %33 = vector.broadcast %11 : vector<8x1xf32> to vector<8x128xf32>
    %34 = arith.mulf %14, %33 : vector<8x128xf32>
    %35 = vector.broadcast %15 : vector<1x128xf32> to vector<8x128xf32>
    %36 = arith.mulf %34, %35 : vector<8x128xf32>
    %cst_16 = arith.constant 0xFF800000 : f32
    %37 = vector.broadcast %cst_16 : f32 to vector<8x128xf32>
    %38 = arith.select %21, %37, %36 : vector<8x128xi1>, vector<8x128xf32>
    %c0_i32 = arith.constant 0 : i32
    %39 = vector.broadcast %c0_i32 : i32 to vector<8x128xi32>
    %40 = arith.cmpi eq, %16, %39 : vector<8x128xi32>
    %41 = vector.shape_cast %32 : vector<8x1xf32> to vector<8x1xf32>
    %42 = vector.broadcast %41 : vector<8x1xf32> to vector<8x128xf32>
    %43 = arith.select %40, %42, %38 : vector<8x128xi1>, vector<8x128xf32>
    %c0_17 = arith.constant 0 : index
    %c0_18 = arith.constant 0 : index
    %44 = vector.load %arg7[%c0_17, %c0_18] : memref<8x128xf32, #tpu.memory_space<vmem>>, vector<8x128xf32>
    tpu.vector_store %arg7[%c0_17, %c0_18], %43 {strides = array<i32>} : memref<8x128xf32, #tpu.memory_space<vmem>>, vector<8x128xf32>,
    return
  }
  func.func @transform_0(%arg0: i32) -> (i32, i32) {
    %c0_i32 = arith.constant 0 : i32
    %c0_i32_0 = arith.constant 0 : i32
    return %arg0, %c0_i32 : i32, i32
  }
  func.func @transform_1(%arg0: i32) -> (i32, i32) {
    %c0_i32 = arith.constant 0 : i32
    %c0_i32_0 = arith.constant 0 : i32
    return %arg0, %c0_i32 : i32, i32
  }
  func.func @transform_2(%arg0: i32) -> (i32, i32) {
    %c0_i32 = arith.constant 0 : i32
    %c0_i32_0 = arith.constant 0 : i32
    %c0_i32_1 = arith.constant 0 : i32
    return %c0_i32, %c0_i32_0 : i32, i32
  }
  func.func @transform_3(%arg0: i32) -> (i32, i32) {
    %c0_i32 = arith.constant 0 : i32
    %c0_i32_0 = arith.constant 0 : i32
    %c0_i32_1 = arith.constant 0 : i32
    return %c0_i32, %c0_i32_0 : i32, i32
  }
  func.func @transform_4(%arg0: i32) -> (i32, i32) {
    %c0_i32 = arith.constant 0 : i32
    %c0_i32_0 = arith.constant 0 : i32
    %c0_i32_1 = arith.constant 0 : i32
    return %c0_i32, %c0_i32_0 : i32, i32
  }
  func.func @transform_5(%arg0: i32) -> (i32, i32) {
    %c0_i32 = arith.constant 0 : i32
    %c0_i32_0 = arith.constant 0 : i32
    %c0_i32_1 = arith.constant 0 : i32
    return %c0_i32, %c0_i32_0 : i32, i32
  }
  func.func @transform_6(%arg0: i32) -> (i32, i32) {
    %c0_i32 = arith.constant 0 : i32
    %c0_i32_0 = arith.constant 0 : i32
    return %arg0, %c0_i32 : i32, i32
  }
}

</mosaic_0001>

<llo_original>
// kernel: tpu_custom_call.1
$region0: #{tpu_custom_call.1}
  #allocation0 [shape = 'u32[]', space=smem, size = 0x4, offset = 0x4, fixed_abs, tag = 'smem constant byte address 0x4 - core index']
  #allocation1 [shape = 'u32[72,128]{1,0:T(1,128)}', space=vmem, size = 0x9000, scoped, tag = 'internal scratch']
  %s0 = inlined_call_operand.vmem [shape: bf16[16,32], index: 0, kind: input, shape index: {}]
  %s1 = inlined_call_operand.vmem [shape: s32[16,1], index: 1, kind: input, shape index: {}]
  %s2 = inlined_call_operand.vmem [shape: bf16[32,16], index: 2, kind: input, shape index: {}]
  %s3 = inlined_call_operand.vmem [shape: f32[1,16], index: 3, kind: input, shape index: {}]
  %s4 = inlined_call_operand.vmem [shape: bf16[16,128], index: 4, kind: input, shape index: {}]
  %s5 = inlined_call_operand.vmem [shape: f32[1,128], index: 5, kind: input, shape index: {}]
  %s6 = inlined_call_operand.hbm [shape: f32[16,128], index: 6, kind: output, shape index: {}]
  %s7 = sld [smem:[#allocation0]]
  $region57: #{tpu_custom_call.1} parent=0
    _
  %s9 = ssub.s32 1, %s7
  %s10 = scalar_select 0, %s9, %s7
  $region1: #{tpu_custom_call.1} parent=0
    #allocation2 [shape = 'u8[8192]{0}', space=vmem, size = 0x2000, scoped, tag = 'output window, operand 0']
    #allocation3 [shape = 's32[2]{0}', space=sflag, size = 0x8, scoped, tag = 'scoped memory for tpu_custom_call.1']
    %11 = vsyncpa [#allocation3], 0
    %s12 = scalar_lea.sflag [#allocation3], 1
    %13 = vsyncpa %s12, 0
    loop: start=0, step=1, limit=4
    $region2: #{tpu_custom_call.1} parent=1 // loop_pre_header
      _
    $region3: #{tpu_custom_call.1} parent=1 // loop_header
      %s15 = sphi 0, %s19
      %p16 = scmp.ge.s32.totalorder %s15, 4
      %s25 = sphi 0, %s27
      %s28 = sphi 0, %s25
      %s29 = sphi 0, %s28
      %s45 = sphi 0, %s29
      %s51 = sphi 0, %s53
      %s54 = sphi 0, %s51
      %s55 = sphi 0, %s54
      %s71 = sphi 0, %s55
      %s75 = sphi 0, %s75
      %s77 = sphi 0, %s75
      %s78 = sphi 0, %s77
      %s92 = sphi 0, %s78
      %s96 = sphi 0, %s96
      %s98 = sphi 0, %s96
      %s99 = sphi 0, %s98
      %s113 = sphi 0, %s99
      %s117 = sphi 0, %s117
      %s119 = sphi 0, %s117
      %s120 = sphi 0, %s119
      %s134 = sphi 0, %s120
      %s138 = sphi 0, %s138
      %s140 = sphi 0, %s138
      %s141 = sphi 0, %s140
      %s155 = sphi 0, %s141
      %s161 = sphi 0, %s163
      %s164 = sphi 0, %s161
      %s165 = sphi 0, %s164
      %s181 = sphi 0, %s165
    $region4: #{tpu_custom_call.1} parent=1 // loop_header_branch
      %18 = sbr.rel (%p16) target = $region8
    $region5: #{tpu_custom_call.1} parent=1 // loop_body
      %s20 = ssub.s32 %s15, 1
      %s21 = ssub.s32 %s15, 2
      %s22 = sadd.s32 %s15, 1
      %s23 = ssub.s32 %s15, %s22
      %p24 = scmp.eq.s32.totalorder %s23, 0
      %s26 = sadd.s32 %s25, 1
      %s27 = scalar_select %p24, %s25, %s26
      %p30 = pneg %p24
      %p31 = scmp.eq.s32.totalorder %s15, 1
      %p32 = por %p30, %p31
      %p33 = scmp.ne.s32.totalorder %s25, %s28
      %p34 = scmp.eq.s32.totalorder %s15, 0
      %p35 = por %p33, %p34
      %p36 = scmp.ne.s32.totalorder %s25, %s28
      %p37 = scmp.eq.s32.totalorder %s20, 1
      %p38 = por %p36, %p37
      %p39 = scmp.ne.s32.totalorder %s28, %s29
      %p40 = scmp.eq.s32.totalorder %s20, 0
      %p41 = por %p39, %p40
      %p42 = scmp.ne.s32.totalorder %s28, %s29
      %p43 = scmp.eq.s32.totalorder %s21, 1
      %p44 = por %p42, %p43
      %p46 = scmp.ne.s32.totalorder %s29, %s45
      %p47 = scmp.eq.s32.totalorder %s21, 0
      %p48 = por %p46, %p47
      %s49 = ssub.s32 %s15, %s22
      %p50 = scmp.eq.s32.totalorder %s49, 0
      %s52 = sadd.s32 %s51, 1
      %s53 = scalar_select %p50, %s51, %s52
      %p56 = pneg %p50
      %p57 = scmp.eq.s32.totalorder %s15, 1
      %p58 = por %p56, %p57
      %p59 = scmp.ne.s32.totalorder %s51, %s54
      %p60 = scmp.eq.s32.totalorder %s15, 0
      %p61 = por %p59, %p60
      %p62 = scmp.ne.s32.totalorder %s51, %s54
      %p63 = scmp.eq.s32.totalorder %s20, 1
      %p64 = por %p62, %p63
      %p65 = scmp.ne.s32.totalorder %s54, %s55
      %p66 = scmp.eq.s32.totalorder %s20, 0
      %p67 = por %p65, %p66
      %p68 = scmp.ne.s32.totalorder %s54, %s55
      %p69 = scmp.eq.s32.totalorder %s21, 1
      %p70 = por %p68, %p69
      %p72 = scmp.ne.s32.totalorder %s55, %s71
      %p73 = scmp.eq.s32.totalorder %s21, 0
      %p74 = por %p72, %p73
      %s76 = sadd.s32 %s75, 1
      %p79 = scmp.eq.s32.totalorder %s15, 1
      %p80 = scmp.ne.s32.totalorder %s75, %s77
      %p81 = scmp.eq.s32.totalorder %s15, 0
      %p82 = por %p80, %p81
      %p83 = scmp.ne.s32.totalorder %s75, %s77
      %p84 = scmp.eq.s32.totalorder %s20, 1
      %p85 = por %p83, %p84
      %p86 = scmp.ne.s32.totalorder %s77, %s78
      %p87 = scmp.eq.s32.totalorder %s20, 0
      %p88 = por %p86, %p87
      %p89 = scmp.ne.s32.totalorder %s77, %s78
      %p90 = scmp.eq.s32.totalorder %s21, 1
      %p91 = por %p89, %p90
      %p93 = scmp.ne.s32.totalorder %s78, %s92
      %p94 = scmp.eq.s32.totalorder %s21, 0
      %p95 = por %p93, %p94
      %s97 = sadd.s32 %s96, 1
      %p100 = scmp.eq.s32.totalorder %s15, 1
      %p101 = scmp.ne.s32.totalorder %s96, %s98
      %p102 = scmp.eq.s32.totalorder %s15, 0
      %p103 = por %p101, %p102
      %p104 = scmp.ne.s32.totalorder %s96, %s98
      %p105 = scmp.eq.s32.totalorder %s20, 1
      %p106 = por %p104, %p105
      %p107 = scmp.ne.s32.totalorder %s98, %s99
      %p108 = scmp.eq.s32.totalorder %s20, 0
      %p109 = por %p107, %p108
      %p110 = scmp.ne.s32.totalorder %s98, %s99
      %p111 = scmp.eq.s32.totalorder %s21, 1
      %p112 = por %p110, %p111
      %p114 = scmp.ne.s32.totalorder %s99, %s113
      %p115 = scmp.eq.s32.totalorder %s21, 0
      %p116 = por %p114, %p115
      %s118 = sadd.s32 %s117, 1
      %p121 = scmp.eq.s32.totalorder %s15, 1
      %p122 = scmp.ne.s32.totalorder %s117, %s119
      %p123 = scmp.eq.s32.totalorder %s15, 0
      %p124 = por %p122, %p123
      %p125 = scmp.ne.s32.totalorder %s117, %s119
      %p126 = scmp.eq.s32.totalorder %s20, 1
      %p127 = por %p125, %p126
      %p128 = scmp.ne.s32.totalorder %s119, %s120
      %p129 = scmp.eq.s32.totalorder %s20, 0
      %p130 = por %p128, %p129
      %p131 = scmp.ne.s32.totalorder %s119, %s120
      %p132 = scmp.eq.s32.totalorder %s21, 1
      %p133 = por %p131, %p132
      %p135 = scmp.ne.s32.totalorder %s120, %s134
      %p136 = scmp.eq.s32.totalorder %s21, 0
      %p137 = por %p135, %p136
      %s139 = sadd.s32 %s138, 1
      %p142 = scmp.eq.s32.totalorder %s15, 1
      %p143 = scmp.ne.s32.totalorder %s138, %s140
      %p144 = scmp.eq.s32.totalorder %s15, 0
      %p145 = por %p143, %p144
      %p146 = scmp.ne.s32.totalorder %s138, %s140
      %p147 = scmp.eq.s32.totalorder %s20, 1
      %p148 = por %p146, %p147
      %p149 = scmp.ne.s32.totalorder %s140, %s141
      %p150 = scmp.eq.s32.totalorder %s20, 0
      %p151 = por %p149, %p150
      %p152 = scmp.ne.s32.totalorder %s140, %s141
      %p153 = scmp.eq.s32.totalorder %s21, 1
      %p154 = por %p152, %p153
      %p156 = scmp.ne.s32.totalorder %s141, %s155
      %p157 = scmp.eq.s32.totalorder %s21, 0
      %p158 = por %p156, %p157
      %s159 = ssub.s32 %s15, %s22
      %p160 = scmp.eq.s32.totalorder %s159, 0
      %s162 = sadd.s32 %s161, 1
      %s163 = scalar_select %p160, %s161, %s162
      %p166 = pneg %p160
      %p167 = scmp.eq.s32.totalorder %s15, 1
      %p168 = por %p166, %p167
      %p169 = scmp.ne.s32.totalorder %s161, %s164
      %p170 = scmp.eq.s32.totalorder %s15, 0
      %p171 = por %p169, %p170
      %p172 = scmp.ne.s32.totalorder %s161, %s164
      %p173 = scmp.eq.s32.totalorder %s20, 1
      %p174 = por %p172, %p173
      %p175 = scmp.ne.s32.totalorder %s164, %s165
      %p176 = scmp.eq.s32.totalorder %s20, 0
      %p177 = por %p175, %p176
      %p178 = scmp.ne.s32.totalorder %s164, %s165
      %p179 = scmp.eq.s32.totalorder %s21, 1
      %p180 = por %p178, %p179
      %p182 = scmp.ne.s32.totalorder %s165, %s181
      %p183 = scmp.eq.s32.totalorder %s21, 0
      %p184 = por %p182, %p183
      %p185 = scmp.le.s32.totalorder 1, %s15
      %p186 = scmp.lt.s32.totalorder %s15, 3
      %p187 = pnand %p185, %p186
      %p188 = pneg %p187
      // Predicated region
      $region9: #{tpu_custom_call.1} parent=5 // pred_check
        _
      $region10: #{tpu_custom_call.1} parent=5 // pred_check_branch
        %190 = sbr.rel (%p187) target = $region12
      $region11: #{tpu_custom_call.1} parent=5 // pred_region
        %s191 = ssub.s32 %s15, 1
        // Predicated region
        $region13: #{tpu_custom_call.1} parent=11 // pred_check
          %p192 = pneg %p88
        $region14: #{tpu_custom_call.1} parent=11 // pred_check_branch
          %194 = sbr.rel (%p192) target = $region16
        $region15: #{tpu_custom_call.1} parent=11 // pred_region
          _
        $region16: #{tpu_custom_call.1} parent=11 // pred_fallthru
          _
        // Predicated region
        $region17: #{tpu_custom_call.1} parent=11 // pred_check
          %p195 = pneg %p109
        $region18: #{tpu_custom_call.1} parent=11 // pred_check_branch
          %197 = sbr.rel (%p195) target = $region20
        $region19: #{tpu_custom_call.1} parent=11 // pred_region
          _
        $region20: #{tpu_custom_call.1} parent=11 // pred_fallthru
          _
        // Predicated region
        $region21: #{tpu_custom_call.1} parent=11 // pred_check
          %p198 = pneg %p130
        $region22: #{tpu_custom_call.1} parent=11 // pred_check_branch
          %200 = sbr.rel (%p198) target = $region24
        $region23: #{tpu_custom_call.1} parent=11 // pred_region
          _
        $region24: #{tpu_custom_call.1} parent=11 // pred_fallthru
          _
        // Predicated region
        $region25: #{tpu_custom_call.1} parent=11 // pred_check
          %p201 = pneg %p151
        $region26: #{tpu_custom_call.1} parent=11 // pred_check_branch
          %203 = sbr.rel (%p201) target = $region28
        $region27: #{tpu_custom_call.1} parent=11 // pred_region
          _
        $region28: #{tpu_custom_call.1} parent=11 // pred_fallthru
          _
      $region12: #{tpu_custom_call.1} parent=5 // pred_fallthru
        _
      %p204 = scmp.lt.s32.totalorder %s15, 2
      // Predicated region
      $region29: #{tpu_custom_call.1} parent=5 // pred_check
        %p205 = pneg %p204
      $region30: #{tpu_custom_call.1} parent=5 // pred_check_branch
        %207 = sbr.rel (%p205) target = $region32
      $region31: #{tpu_custom_call.1} parent=5 // pred_region
        // Predicated region
        $region33: #{tpu_custom_call.1} parent=31 // pred_check
          %p208 = pneg %p35
        $region34: #{tpu_custom_call.1} parent=31 // pred_check_branch
          %210 = sbr.rel (%p208) target = $region36
        $region35: #{tpu_custom_call.1} parent=31 // pred_region
          %p211 = scmp.lt.s32.totalorder %s15, 1
          %s212 = scalar_select %p211, %s15, 1
          %s213 = smul.addr %s212, 4
          %s214 = scalar_lea.vmem %s0, %s213
        $region36: #{tpu_custom_call.1} parent=31 // pred_fallthru
          _
        // Predicated region
        $region37: #{tpu_custom_call.1} parent=31 // pred_check
          %p215 = pneg %p61
        $region38: #{tpu_custom_call.1} parent=31 // pred_check_branch
          %217 = sbr.rel (%p215) target = $region40
        $region39: #{tpu_custom_call.1} parent=31 // pred_region
          %p218 = scmp.lt.s32.totalorder %s15, 1
          %s219 = scalar_select %p218, %s15, 1
          %s220 = smul.addr %s219, 8
          %s221 = scalar_lea.vmem %s1, %s220
        $region40: #{tpu_custom_call.1} parent=31 // pred_fallthru
          _
      $region32: #{tpu_custom_call.1} parent=5 // pred_fallthru
        _
      %p222 = scmp.le.s32.totalorder 1, %s15
      %p223 = scmp.lt.s32.totalorder %s15, 3
      %p224 = pnand %p222, %p223
      %p225 = pneg %p224
      // Predicated region
      $region41: #{tpu_custom_call.1} parent=5 // pred_check
        _
      $region42: #{tpu_custom_call.1} parent=5 // pred_check_branch
        %227 = sbr.rel (%p224) target = $region44
      $region43: #{tpu_custom_call.1} parent=5 // pred_region
        %s228 = ssub.s32 %s15, 1
        %p229 = scmp.lt.s32.totalorder %s20, 1
        %s230 = scalar_select %p229, %s20, 1
        %s231 = smul.addr %s230, 4
        %s232 = scalar_lea.vmem %s0, %s231
        %p233 = pneg %p41
        %p234 = pneg %p38
        %p235 = scmp.lt.s32.totalorder %s20, 1
        %s236 = scalar_select %p235, %s20, 1
        %s237 = smul.addr %s236, 8
        %s238 = scalar_lea.vmem %s1, %s237
        %p239 = pneg %p67
        %p240 = pneg %p64
        %p241 = pneg %p88
        %p242 = pneg %p85
        %p243 = pneg %p109
        %p244 = pneg %p106
        %p245 = pneg %p130
        %p246 = pneg %p127
        %p247 = pneg %p151
        %p248 = pneg %p148
        %p249 = pneg %p177
        %p250 = pneg %p174
        %s251 = sand.u32 %s164, 1
        %s252 = scalar_lea.sflag [#allocation3], %s251
        %s253 = sand.u32 %s164, 1
        %s254 = smul.addr %s253, 8
        %s255 = scalar_lea.vmem [#allocation2], %s254
        %p256 = scmp.lt.s32.totalorder %s20, 1
        %s257 = scalar_select %p256, %s20, 1
        %s258 = smul.addr %s257, 4
        %s259 = scalar_lea.vmem %s0, %s258
        %p260 = scmp.lt.s32.totalorder %s20, 1
        %s261 = scalar_select %p260, %s20, 1
        %s262 = smul.addr %s261, 8
        %s263 = scalar_lea.vmem %s1, %s262
        %v265 = vld [vmem:[%s259] sm:$0xf]
        %v266 = vld [vmem:[%s2] sm:$0xf]
        %v267 = vld [vmem:[%s2 + $0x4] sm:$0xf]
        %v268 = vld [vmem:[%s2 + $0x8] sm:$0xf]
        %v269 = vld [vmem:[%s2 + $0xc] sm:$0xf]
        %v270 = vld [vmem:[%s3] sm:$0x1]
        %v272 = vperm.slane %v270, 0
        %v278 = vunpack.c.l.b16 %v266
        %v279 = vunpack.c.l.b16 %v267
        %v280 = vunpack.c.l.b16 %v268
        %v281 = vunpack.c.l.b16 %v269
        %v282 = vpack.c.b16 %v279, %v278
        %v283 = vpack.c.b16 %v281, %v280
        %vm286 = vcmask 261120
        %v288 = vsel %vm286, %v265, 0
        %290 = vmatpush.bf16.msra.mxu0 0
        %291 = vmatpush.bf16.msra.mxu0 0
        %292 = vmatpush.bf16.msra.mxu0 0
        %293 = vmatpush.bf16.msra.mxu0 0
        %294 = vmatpush.bf16.msra.mxu0 0
        %295 = vmatpush.bf16.msra.mxu0 0
        %296 = vmatpush.bf16.msra.mxu0 %v283
        %297 = vmatpush.bf16.msra.mxu0 %v282
        %298 = vmatmul.bf16.gmra.mxu0 %v288
        %v299 = vpop.f32.mrf.mxu0
        %v300 = vadd.f32 %v272, %v299
        %v301 = vpop.f32.mrf.mxu0
        %302 = vdwg.mxu0
        %v303 = vmul.f32 %v300, %v300
        %vm304 = vcmask 130048
        %v305 = vsel %vm304, %v303, 0.0
        %306 = vadd.xlane.f32.xlu0 %v305
        %v307 = vpop.xlane.xlu0 %306
        %v308 = vrsqrt.pop %v307
        %v309 = vmul.f32 %v308, %v307
        %v310 = vmul.f32 %v309, %v308
        %v311 = vmul.f32 0.5, %v310
        %v312 = vsub.f32 1.5, %v311
        %v313 = vmul.f32 %v308, %v312
        %vm314 = vweird.f32 %v307
        %vm315 = vweird.f32 %v308
        %vm316 = vmor %vm314, %vm315
        %v317 = vsel %vm316, %v308, %v313
        %v318 = vmin.f32 %v317, 1e+08
        %v319 = vpack.c.bf16 %v300, %v300
        %v320 = vld [vmem:[%s4] sm:$0xf]
        %v321 = vld [vmem:[%s4 + $0x4] sm:$0xf]
        %v324 = vunpack.c.l.b16 %v320
        %v325 = vunpack.c.l.b16 %v321
        %v326 = vpack.c.b16 %v325, %v324
        %v329 = vsel %vm304, %v319, 0
        %331 = vmatpush.bf16.msra.mxu0 0
        %332 = vmatpush.bf16.msra.mxu0 0
        %333 = vmatpush.bf16.msra.mxu0 0
        %334 = vmatpush.bf16.msra.mxu0 0
        %335 = vmatpush.bf16.msra.mxu0 0
        %336 = vmatpush.bf16.msra.mxu0 0
        %337 = vmatpush.bf16.msra.mxu0 0
        %338 = vmatpush.bf16.msra.mxu0 %v326
        %339 = vmatmul.bf16.gmra.mxu0 %v329
        %v340 = vpop.f32.mrf.mxu0
        %v341 = vadd.f32 0.0, %v340
        %v342 = vpop.f32.mrf.mxu0
        %343 = vdwg.mxu0
        %v344 = vld [vmem:[%s5] sm:$0x1]
        %v345 = vlaneseq
        %v346 = vand.u32 %v345, 127
        %v347 = vld [vmem:[%s263] sm:$0xff]
        %v348 = vadd.s32 %v347, 1
        %349 = vset.pattern.permute.xlu0 0
        %350 = vperm.xlu0 %349, %v348
        %v351 = vpop.permute.xlu0 %350
        %vm352 = vcmp.eq.s32.totalorder %v346, %v351
        %v353 = vsel %vm352, 1, 0
        %v354 = vcvt.s32.f32 %v353
        %v355 = vmul.f32 %v341, %v354
        %356 = vadd.xlane.f32.xlu0 %v355
        %v357 = vpop.xlane.xlu0 %356
        %v359 = vperm.slane %v344, 0
        %v361 = vmul.f32 %v359, %v354
        %362 = vadd.xlane.f32.xlu0 %v361
        %v363 = vpop.xlane.xlu0 %362
        %v364 = vmul.f32 %v318, %v363
        %v365 = vmul.f32 %v357, %v364
        %v366 = vmul.f32 %v341, %v318
        %v367 = vmul.f32 %v366, %v359
        %v368 = vsel %vm352, -inf, %v367
        %vm369 = vcmp.eq.s32.totalorder %v346, 0
        %v370 = vsel %vm369, %v365, %v368
        %371 = vst [vmem:[%s255] sm:$0xff] %v370
        %s372 = sand.u32 %s164, 1
        %s373 = scalar_lea.sflag [#allocation3], %s372
        %s374 = sand.u32 %s164, 1
        %s375 = smul.addr %s374, 8
        %s376 = scalar_lea.vmem [#allocation2], %s375
        // Predicated region
        $region45: #{tpu_custom_call.1} parent=43 // pred_check
          %p377 = pneg %p174
        $region46: #{tpu_custom_call.1} parent=43 // pred_check_branch
          %379 = sbr.rel (%p377) target = $region48
        $region47: #{tpu_custom_call.1} parent=43 // pred_region
          %381 = vsyncadd %s373, 0
          %s382 = smul.addr %s20, 8
          %s383 = scalar_lea.hbm %s6, %s382
          %s385 = sshll.u32 %s376, 4
          %s386 = int_to_ptr.vmem [resolvable:$true] %s385
          %s387 = sshll.u32 %s383, 4
          %s388 = int_to_ptr.hbm [resolvable:$true] %s387
          %390 = dma.vmem_to_hbm [thread:$0]  %s386, 128, %s388, %s373
        $region48: #{tpu_custom_call.1} parent=43 // pred_fallthru
          _
      $region44: #{tpu_custom_call.1} parent=5 // pred_fallthru
        _
      %p391 = scmp.le.s32.totalorder 2, %s15
      // Predicated region
      $region49: #{tpu_custom_call.1} parent=5 // pred_check
        %p392 = pneg %p391
      $region50: #{tpu_custom_call.1} parent=5 // pred_check_branch
        %394 = sbr.rel (%p392) target = $region52
      $region51: #{tpu_custom_call.1} parent=5 // pred_region
        %s395 = ssub.s32 %s15, 2
        // Predicated region
        $region53: #{tpu_custom_call.1} parent=51 // pred_check
          %p396 = pneg %p180
        $region54: #{tpu_custom_call.1} parent=51 // pred_check_branch
          %398 = sbr.rel (%p396) target = $region56
        $region55: #{tpu_custom_call.1} parent=51 // pred_region
          %s399 = sand.u32 %s165, 1
          %s400 = scalar_lea.sflag [#allocation3], %s399
          %s401 = sand.u32 %s165, 1
          %s402 = smul.addr %s401, 8
          %s403 = scalar_lea.vmem [#allocation2], %s402
          %405 = dma.done %s400, 128
        $region56: #{tpu_custom_call.1} parent=51 // pred_fallthru
          _
      $region52: #{tpu_custom_call.1} parent=5 // pred_fallthru
        _
    $region6: #{tpu_custom_call.1} parent=1 // loop_footer
      %s19 = sadd.s32 1, %s15
    $region7: #{tpu_custom_call.1} parent=1 // loop_footer_branch
      %14 = sbr.rel target = $region3
    $region8: #{tpu_custom_call.1} parent=1 // loop_exit
      _
    %406 = vsyncpa [#allocation3], 1
    %s407 = scalar_lea.sflag [#allocation3], 1
    %408 = vsyncpa %s407, 1

</llo_original>
